<compile_context>
chip_gen: v6e
topology: v6e:2x2x1
jax: 0.10.0
libtpu: 0.0.40
codegen_flags: <defaults>
</compile_context>

<pallas_src>
import jax
import jax.numpy as jnp
from jax.experimental import pallas as pl
from jax.experimental.pallas import tpu as pltpu


def _round_up(x, m):
    return ((x + m - 1) // m) * m


def _pad_cols(x, new_cols):
    pad = new_cols - x.shape[1]
    return x if pad == 0 else jnp.pad(x, ((0, 0), (0, pad)))


def _combiner_kernel(z_ref, h_ref, w1_ref, b1_ref, w23_ref, b23_ref,
                     loc_ref, scale_ref):
    """One batch tile: tanh(z@W1+b1) blended with h, then fused loc||scale projection."""
    z = z_ref[...]
    h = h_ref[...].astype(jnp.float32)

    # lin_z_to_hidden + tanh  (MXU matmul; elementwise kept in f32)
    pre = jnp.dot(z, w1_ref[...], preferred_element_type=jnp.float32) + b1_ref[...]
    h_combined = 0.5 * (jnp.tanh(pre) + h)

    # Fused lin_hidden_to_loc || lin_hidden_to_scale: single MXU pass.
    fused = (jnp.dot(h_combined.astype(w23_ref.dtype), w23_ref[...],
                     preferred_element_type=jnp.float32) + b23_ref[...])

    z_pad = loc_ref.shape[-1]            # 128-aligned -> static, vreg-aligned slices
    loc = fused[:, :z_pad]
    s_pre = fused[:, z_pad:]

    # Softplus (PyTorch default beta=1, threshold=20) on the scale half only.
    scale = jnp.where(s_pre > 20.0, s_pre,
                      jnp.log1p(jnp.exp(jnp.minimum(s_pre, 20.0))))

    loc_ref[...] = loc.astype(loc_ref.dtype)
    scale_ref[...] = scale.astype(scale_ref.dtype)


def normal_combiner(z_t_1, h_rnn, params, *, block_b=4096, mxu_dtype=None,
                    out_dtype=None):
    """params: W1 (z,rnn), b1 (1,rnn), W2 (rnn,z), b2 (1,z), W3 (rnn,z), b3 (1,z).

    Weights are stored pre-transposed (in_dim, out_dim) so the kernel does x @ W.
    `mxu_dtype=jnp.bfloat16` feeds bf16 operands to the MXU (h_rnn, biases and
    all elementwise math stay in f32). `out_dtype` lets downstream consumers
    take bf16 outputs to halve writeback bytes.
    """
    B, z_dim = z_t_1.shape
    rnn_dim = h_rnn.shape[1]
    out_dtype = out_dtype or z_t_1.dtype

    # Pad the projection output dim to a lane-dense multiple of 128 (one-time,
    # tiny weight/bias pad; batch inputs are NOT padded).
    z_pad = _round_up(z_dim, 128)

    w1 = params["W1"]
    b1 = params["b1"].astype(jnp.float32)
    w23 = jnp.concatenate([_pad_cols(params["W2"], z_pad),
                           _pad_cols(params["W3"], z_pad)], axis=1)
    b23 = jnp.concatenate([_pad_cols(params["b2"], z_pad),
                           _pad_cols(params["b3"], z_pad)], axis=1).astype(jnp.float32)

    z_in, h_in = z_t_1, h_rnn
    if mxu_dtype is not None:
        # Cast only MXU operands; h_rnn / biases / blend stay f32.
        z_in = z_in.astype(mxu_dtype)
        w1 = w1.astype(mxu_dtype)
        w23 = w23.astype(mxu_dtype)

    # Batch tiling (no wrapper pad): pick a large tile, sublane-aligned
    # (16 rows for packed bf16 inputs, else 8), and aim for >=2 grid steps so
    # the "parallel" axis can shard across v7x's two TensorCores.
    row_align = 16 if (jnp.dtype(z_in.dtype).itemsize < 4 and B >= 16) else 8
    if B <= row_align:
        tb = B                                      # single exact block
    else:
        tb = min(block_b, _round_up(pl.cdiv(B, 2), row_align))
    grid = (pl.cdiv(B, tb),)                        # partial last block masked by Pallas

    # VMEM limit from the real footprint (double-buffered batch tiles + resident
    # weights) with a little slack, clamped so it stays sane on v7x's 64 MiB.
    tile_bytes = tb * (z_dim * jnp.dtype(z_in.dtype).itemsize
                       + rnn_dim * jnp.dtype(h_in.dtype).itemsize
                       + 2 * z_pad * jnp.dtype(out_dtype).itemsize)
    weight_bytes = (w1.size * jnp.dtype(w1.dtype).itemsize
                    + w23.size * jnp.dtype(w23.dtype).itemsize
                    + (b1.size + b23.size) * 4)
    vmem_limit = int(min(max(2 * tile_bytes + 2 * weight_bytes + (4 << 20),
                             16 << 20), 48 << 20))

    batch_spec = lambda feat: pl.BlockSpec((tb, feat), lambda i: (i, 0))
    resident = lambda shape: pl.BlockSpec(shape, lambda i: (0, 0))  # DMA'd once

    loc_pad, scale_pad = pl.pallas_call(
        _combiner_kernel,
        out_shape=(jax.ShapeDtypeStruct((B, z_pad), out_dtype),
                   jax.ShapeDtypeStruct((B, z_pad), out_dtype)),
        grid=grid,
        in_specs=[
            batch_spec(z_dim),               # z_t_1 tile
            batch_spec(rnn_dim),             # h_rnn tile
            resident((z_dim, rnn_dim)),      # W1
            resident((1, rnn_dim)),          # b1
            resident((rnn_dim, 2 * z_pad)),  # W2 || W3  (zero-padded to 128-lane)
            resident((1, 2 * z_pad)),        # b2 || b3
        ],
        out_specs=(batch_spec(z_pad),        # loc   (lane-dense, unmasked stores)
                   batch_spec(z_pad)),       # scale (lane-dense, unmasked stores)
        compiler_params=pltpu.CompilerParams(
            dimension_semantics=("parallel",),
            vmem_limit_bytes=vmem_limit,
        ),
    )(z_in, h_in, w1, b1, w23, b23)

    if z_pad == z_dim:
        return loc_pad, scale_pad
    # Lane de-pad (only needed when z_dim is not 128-aligned); consumers that
    # tolerate the padded layout can take loc_pad/scale_pad directly.
    return loc_pad[:, :z_dim], scale_pad[:, :z_dim]


def _reference(z_t_1, h_rnn, params):
    pre = z_t_1 @ params["W1"] + params["b1"]
    h_combined = 0.5 * (jnp.tanh(pre) + h_rnn)
    loc = h_combined @ params["W2"] + params["b2"]
    s_pre = h_combined @ params["W3"] + params["b3"]
    scale = jnp.where(s_pre > 20.0, s_pre,
                      jnp.log1p(jnp.exp(jnp.minimum(s_pre, 20.0))))
    return loc, scale


def _make_params(key, z_dim, rnn_dim):
    k1, k2, k3, k4, k5, k6 = jax.random.split(key, 6)
    return {
        "W1": 0.1 * jax.random.normal(k1, (z_dim, rnn_dim), dtype=jnp.float32),
        "b1": 0.1 * jax.random.normal(k2, (1, rnn_dim), dtype=jnp.float32),
        "W2": 0.1 * jax.random.normal(k3, (rnn_dim, z_dim), dtype=jnp.float32),
        "b2": 0.1 * jax.random.normal(k4, (1, z_dim), dtype=jnp.float32),
        "W3": 0.1 * jax.random.normal(k5, (rnn_dim, z_dim), dtype=jnp.float32),
        "b3": 0.1 * jax.random.normal(k6, (1, z_dim), dtype=jnp.float32),
    }


if __name__ == "__main__":
    z_dim, rnn_dim = 32, 64
    key = jax.random.PRNGKey(0)
    k_p, k_z, k_h, k_z2, k_h2 = jax.random.split(key, 5)
    params = _make_params(k_p, z_dim, rnn_dim)

    # --- case 1: small batch, single exact tile, f32 MXU (tight tolerance) ---
    B = 8
    z_t_1 = jax.random.normal(k_z, (B, z_dim), dtype=jnp.float32)
    h_rnn = jax.random.normal(k_h, (B, rnn_dim), dtype=jnp.float32)

    loc, scale = normal_combiner(z_t_1, h_rnn, params)
    jax.block_until_ready((loc, scale))
    ref_loc, ref_scale = _reference(z_t_1, h_rnn, params)
    assert jnp.allclose(loc, ref_loc, atol=1e-5, rtol=1e-5)
    assert jnp.allclose(scale, ref_scale, atol=1e-5, rtol=1e-5)

    # --- case 2: ragged batch, default tiling -> 2 grid steps, masked partial block ---
    B2 = 20
    z2 = jax.random.normal(k_z2, (B2, z_dim), dtype=jnp.float32)
    h2 = jax.random.normal(k_h2, (B2, rnn_dim), dtype=jnp.float32)
    loc2, scale2 = normal_combiner(z2, h2, params)
    jax.block_until_ready((loc2, scale2))
    ref_loc2, ref_scale2 = _reference(z2, h2, params)
    assert jnp.allclose(loc2, ref_loc2, atol=1e-5, rtol=1e-5)
    assert jnp.allclose(scale2, ref_scale2, atol=1e-5, rtol=1e-5)

    # --- case 3: small explicit tile -> 3 grid steps, masked partial block ---
    loc3, scale3 = normal_combiner(z2, h2, params, block_b=8)
    jax.block_until_ready((loc3, scale3))
    assert jnp.allclose(loc3, ref_loc2, atol=1e-5, rtol=1e-5)
    assert jnp.allclose(scale3, ref_scale2, atol=1e-5, rtol=1e-5)

    # --- case 4: bf16 MXU operands (HBM/compute optimization), loose tolerance ---
    loc4, scale4 = normal_combiner(z_t_1, h_rnn, params, mxu_dtype=jnp.bfloat16)
    jax.block_until_ready((loc4, scale4))
    assert jnp.allclose(loc4, ref_loc, atol=5e-2, rtol=5e-2)
    assert jnp.allclose(scale4, ref_scale, atol=5e-2, rtol=5e-2)

    print("KERNEL_OK")
</pallas_src>

<mosaic_0001>
module attributes {stable_mosaic.version = 11 : i64} {
  func.func @_combiner_kernel(%arg0: i32, %arg1: memref<8x32xf32, #tpu.memory_space<vmem>>, %arg2: memref<8x64xf32, #tpu.memory_space<vmem>>, %arg3: memref<32x64xf32, #tpu.memory_space<vmem>>, %arg4: memref<1x64xf32, #tpu.memory_space<vmem>>, %arg5: memref<64x256xf32, #tpu.memory_space<vmem>>, %arg6: memref<1x256xf32, #tpu.memory_space<vmem>>, %arg7: memref<8x128xf32, #tpu.memory_space<vmem>>, %arg8: memref<8x128xf32, #tpu.memory_space<vmem>>) attributes {dimension_semantics = [#tpu.dimension_semantics<parallel>], iteration_bounds = array<i64: 1>, scalar_prefetch = 0 : i64, scratch_operands = 0 : i64, tpu.core_type = #tpu.core_type<tc>, window_params = [{transform_indices = @transform_0, window_bounds = array<i64: 8, 32>}, {transform_indices = @transform_1, window_bounds = array<i64: 8, 64>}, {pipeline_mode = #tpu.pipeline_mode<synchronous>, transform_indices = @transform_2, window_bounds = array<i64: 32, 64>}, {pipeline_mode = #tpu.pipeline_mode<synchronous>, transform_indices = @transform_3, window_bounds = array<i64: 1, 64>}, {pipeline_mode = #tpu.pipeline_mode<synchronous>, transform_indices = @transform_4, window_bounds = array<i64: 64, 256>}, {pipeline_mode = #tpu.pipeline_mode<synchronous>, transform_indices = @transform_5, window_bounds = array<i64: 1, 256>}, {transform_indices = @transform_6, window_bounds = array<i64: 8, 128>}, {transform_indices = @transform_7, window_bounds = array<i64: 8, 128>}]} {
    %c0 = arith.constant 0 : index
    %c0_0 = arith.constant 0 : index
    %0 = vector.load %arg1[%c0, %c0_0] : memref<8x32xf32, #tpu.memory_space<vmem>>, vector<8x32xf32>
    %c0_1 = arith.constant 0 : index
    %c0_2 = arith.constant 0 : index
    %1 = vector.load %arg2[%c0_1, %c0_2] : memref<8x64xf32, #tpu.memory_space<vmem>>, vector<8x64xf32>
    %c0_3 = arith.constant 0 : index
    %c0_4 = arith.constant 0 : index
    %2 = vector.load %arg3[%c0_3, %c0_4] : memref<32x64xf32, #tpu.memory_space<vmem>>, vector<32x64xf32>
    %cst = arith.constant dense<0.000000e+00> : vector<8x64xf32>
    %3 = tpu.matmul %0, %2, %cst {dimension_numbers = #tpu.dot_dimension_numbers<[1], [0], [0], [1], [0, 0, 1, 1], [], []>} : vector<8x32xf32>, vector<32x64xf32>, vector<8x64xf32> -> vector<8x64xf32>
    %c0_5 = arith.constant 0 : index
    %c0_6 = arith.constant 0 : index
    %4 = vector.load %arg4[%c0_5, %c0_6] : memref<1x64xf32, #tpu.memory_space<vmem>>, vector<1x64xf32>
    %5 = vector.broadcast %4 : vector<1x64xf32> to vector<8x64xf32>
    %6 = arith.addf %3, %5 : vector<8x64xf32>
    %7 = math.tanh %6 : vector<8x64xf32>
    %8 = arith.addf %7, %1 : vector<8x64xf32>
    %cst_7 = arith.constant 5.000000e-01 : f32
    %9 = vector.broadcast %cst_7 : f32 to vector<8x64xf32>
    %10 = arith.mulf %9, %8 : vector<8x64xf32>
    %c0_8 = arith.constant 0 : index
    %c0_9 = arith.constant 0 : index
    %11 = vector.load %arg5[%c0_8, %c0_9] : memref<64x256xf32, #tpu.memory_space<vmem>>, vector<64x256xf32>
    %cst_10 = arith.constant dense<0.000000e+00> : vector<8x256xf32>
    %12 = tpu.matmul %10, %11, %cst_10 {dimension_numbers = #tpu.dot_dimension_numbers<[1], [0], [0], [1], [0, 0, 1, 1], [], []>} : vector<8x64xf32>, vector<64x256xf32>, vector<8x256xf32> -> vector<8x256xf32>
    %c0_11 = arith.constant 0 : index
    %c0_12 = arith.constant 0 : index
    %13 = vector.load %arg6[%c0_11, %c0_12] : memref<1x256xf32, #tpu.memory_space<vmem>>, vector<1x256xf32>
    %14 = vector.broadcast %13 : vector<1x256xf32> to vector<8x256xf32>
    %15 = arith.addf %12, %14 : vector<8x256xf32>
    %16 = vector.extract_strided_slice %15 {offsets = [0, 0], sizes = [8, 128], strides = [1, 1]} : vector<8x256xf32> to vector<8x128xf32>
    %17 = vector.extract_strided_slice %15 {offsets = [0, 128], sizes = [8, 128], strides = [1, 1]} : vector<8x256xf32> to vector<8x128xf32>
    %cst_13 = arith.constant 2.000000e+01 : f32
    %18 = vector.broadcast %cst_13 : f32 to vector<8x128xf32>
    %19 = arith.cmpf ogt, %17, %18 : vector<8x128xf32>
    %cst_14 = arith.constant 2.000000e+01 : f32
    %20 = vector.broadcast %cst_14 : f32 to vector<8x128xf32>
    %21 = arith.minimumf %17, %20 : vector<8x128xf32>
    %22 = math.exp %21 : vector<8x128xf32>
    %23 = math.log1p %22 : vector<8x128xf32>
    %24 = arith.select %19, %17, %23 : vector<8x128xi1>, vector<8x128xf32>
    %c0_15 = arith.constant 0 : index
    %c0_16 = arith.constant 0 : index
    %25 = vector.load %arg7[%c0_15, %c0_16] : memref<8x128xf32, #tpu.memory_space<vmem>>, vector<8x128xf32>
    tpu.vector_store %arg7[%c0_15, %c0_16], %16 {strides = array<i32>} : memref<8x128xf32, #tpu.memory_space<vmem>>, vector<8x128xf32>,
    %c0_17 = arith.constant 0 : index
    %c0_18 = arith.constant 0 : index
    %26 = vector.load %arg8[%c0_17, %c0_18] : memref<8x128xf32, #tpu.memory_space<vmem>>, vector<8x128xf32>
    tpu.vector_store %arg8[%c0_17, %c0_18], %24 {strides = array<i32>} : memref<8x128xf32, #tpu.memory_space<vmem>>, vector<8x128xf32>,
    return
  }
  func.func @transform_0(%arg0: i32) -> (i32, i32) {
    %c0_i32 = arith.constant 0 : i32
    %c0_i32_0 = arith.constant 0 : i32
    return %arg0, %c0_i32 : i32, i32
  }
  func.func @transform_1(%arg0: i32) -> (i32, i32) {
    %c0_i32 = arith.constant 0 : i32
    %c0_i32_0 = arith.constant 0 : i32
    return %arg0, %c0_i32 : i32, i32
  }
  func.func @transform_2(%arg0: i32) -> (i32, i32) {
    %c0_i32 = arith.constant 0 : i32
    %c0_i32_0 = arith.constant 0 : i32
    %c0_i32_1 = arith.constant 0 : i32
    return %c0_i32, %c0_i32_0 : i32, i32
  }
  func.func @transform_3(%arg0: i32) -> (i32, i32) {
    %c0_i32 = arith.constant 0 : i32
    %c0_i32_0 = arith.constant 0 : i32
    %c0_i32_1 = arith.constant 0 : i32
    return %c0_i32, %c0_i32_0 : i32, i32
  }
  func.func @transform_4(%arg0: i32) -> (i32, i32) {
    %c0_i32 = arith.constant 0 : i32
    %c0_i32_0 = arith.constant 0 : i32
    %c0_i32_1 = arith.constant 0 : i32
    return %c0_i32, %c0_i32_0 : i32, i32
  }
  func.func @transform_5(%arg0: i32) -> (i32, i32) {
    %c0_i32 = arith.constant 0 : i32
    %c0_i32_0 = arith.constant 0 : i32
    %c0_i32_1 = arith.constant 0 : i32
    return %c0_i32, %c0_i32_0 : i32, i32
  }
  func.func @transform_6(%arg0: i32) -> (i32, i32) {
    %c0_i32 = arith.constant 0 : i32
    %c0_i32_0 = arith.constant 0 : i32
    return %arg0, %c0_i32 : i32, i32
  }
  func.func @transform_7(%arg0: i32) -> (i32, i32) {
    %c0_i32 = arith.constant 0 : i32
    %c0_i32_0 = arith.constant 0 : i32
    return %arg0, %c0_i32 : i32, i32
  }
}

</mosaic_0001>

<llo_original>
// kernel: tpu_custom_call.1
$region0: #{tpu_custom_call.1}
  #allocation0 [shape = 'u32[]', space=smem, size = 0x4, offset = 0x4, fixed_abs, tag = 'smem constant byte address 0x4 - core index']
  #allocation1 [shape = 'u32[144,128]{1,0:T(1,128)}', space=vmem, size = 0x12000, scoped, tag = 'internal scratch']
  %s0 = inlined_call_operand.hbm [shape: f32[8,32], index: 0, kind: input, shape index: {}]
  %s1 = inlined_call_operand.hbm [shape: f32[8,64], index: 1, kind: input, shape index: {}]
  %s2 = inlined_call_operand.hbm [shape: f32[32,64], index: 2, kind: input, shape index: {}]
  %s3 = inlined_call_operand.vmem [shape: f32[1,64], index: 3, kind: input, shape index: {}]
  %s4 = inlined_call_operand.hbm [shape: f32[64,256], index: 4, kind: input, shape index: {}]
  %s5 = inlined_call_operand.vmem [shape: f32[1,256], index: 5, kind: input, shape index: {}]
  %s6 = inlined_call_operand.hbm [shape: f32[8,128], index: 6, kind: output, shape index: {0}]
  %s7 = inlined_call_operand.hbm [shape: f32[8,128], index: 7, kind: output, shape index: {1}]
  %8 = xla_tuple %s6, %s7
  %s9 = sld [smem:[#allocation0]]
  $region58: #{tpu_custom_call.1} parent=0
    _
  %s11 = ssub.s32 1, %s9
  %s12 = scalar_select 0, %s11, %s9
  $region1: #{tpu_custom_call.1} parent=0
    #allocation2 [shape = 'u8[4096]{0}', space=vmem, size = 0x1000, scoped, tag = 'input window, operand 0, single buffered']
    #allocation3 [shape = 's32[1]{0}', space=sflag, size = 0x4, scoped, tag = 'scoped memory for tpu_custom_call.1']
    #allocation4 [shape = 's32[1]{0}', space=sflag, size = 0x4, scoped, tag = 'scoped memory for tpu_custom_call.1']
    #allocation5 [shape = 'u8[4096]{0}', space=vmem, size = 0x1000, scoped, tag = 'input window, operand 1, single buffered']
    #allocation6 [shape = 's32[1]{0}', space=sflag, size = 0x4, scoped, tag = 'scoped memory for tpu_custom_call.1']
    #allocation7 [shape = 'u8[16384]{0}', space=vmem, size = 0x4000, scoped, tag = 'input window, operand 2, single buffered']
    #allocation8 [shape = 'u8[65536]{0}', space=vmem, size = 0x10000, scoped, tag = 'input window, operand 4, single buffered']
    #allocation9 [shape = 's32[1]{0}', space=sflag, size = 0x4, scoped, tag = 'scoped memory for tpu_custom_call.1']
    #allocation10 [shape = 'u8[4096]{0}', space=vmem, size = 0x1000, scoped, tag = 'output window, operand 0, single buffered']
    #allocation11 [shape = 'u8[4096]{0}', space=vmem, size = 0x1000, scoped, tag = 'output window, operand 1, single buffered']
    #allocation12 [shape = 's32[1]{0}', space=sflag, size = 0x4, scoped, tag = 'scoped memory for tpu_custom_call.1']
    %13 = vsyncpa [#allocation3], 0
    %14 = vsyncpa [#allocation6], 0
    %15 = vsyncpa [#allocation9], 0
    %16 = vsyncpa [#allocation4], 0
    %17 = vsyncpa [#allocation12], 0
    // Predicated region
    $region2: #{tpu_custom_call.1} parent=1 // pred_check
      _
    $region3: #{tpu_custom_call.1} parent=1 // pred_check_branch
      %19 = sbr.rel (0) target = $region5
    $region4: #{tpu_custom_call.1} parent=1 // pred_region
      %s21 = ssub.s32 128, 128
      %22 = vsyncadd [#allocation3], %s21
      %s24 = sshll.u32 [#allocation2], 4
      %s25 = int_to_ptr.vmem [resolvable:$true] %s24
      %27 = dma.hbm_to_vmem [thread:$0]  %s0, 128, %s25, [#allocation3]
    $region5: #{tpu_custom_call.1} parent=1 // pred_fallthru
      _
    // Predicated region
    $region6: #{tpu_custom_call.1} parent=1 // pred_check
      _
    $region7: #{tpu_custom_call.1} parent=1 // pred_check_branch
      %29 = sbr.rel (0) target = $region9
    $region8: #{tpu_custom_call.1} parent=1 // pred_region
      %s31 = ssub.s32 128, 128
      %32 = vsyncadd [#allocation6], %s31
      %s34 = sshll.u32 [#allocation5], 4
      %s35 = int_to_ptr.vmem [resolvable:$true] %s34
      %37 = dma.hbm_to_vmem [thread:$0]  %s1, 128, %s35, [#allocation6]
    $region9: #{tpu_custom_call.1} parent=1 // pred_fallthru
      _
    // Predicated region
    $region10: #{tpu_custom_call.1} parent=1 // pred_check
      _
    $region11: #{tpu_custom_call.1} parent=1 // pred_check_branch
      %39 = sbr.rel (0) target = $region13
    $region12: #{tpu_custom_call.1} parent=1 // pred_region
      %s41 = ssub.s32 512, 512
      %42 = vsyncadd [#allocation6], %s41
      %s43 = sshll.u32 [#allocation7], 4
      %s44 = int_to_ptr.vmem [resolvable:$true] %s43
      %49 = dma.hbm_to_vmem [thread:$0]  %s2, 512, %s44, [#allocation6], 128, 128, 8
    $region13: #{tpu_custom_call.1} parent=1 // pred_fallthru
      _
    // Predicated region
    $region14: #{tpu_custom_call.1} parent=1 // pred_check
      _
    $region15: #{tpu_custom_call.1} parent=1 // pred_check_branch
      %51 = sbr.rel (0) target = $region17
    $region16: #{tpu_custom_call.1} parent=1 // pred_region
      _
    $region17: #{tpu_custom_call.1} parent=1 // pred_fallthru
      _
    // Predicated region
    $region18: #{tpu_custom_call.1} parent=1 // pred_check
      _
    $region19: #{tpu_custom_call.1} parent=1 // pred_check_branch
      %53 = sbr.rel (0) target = $region21
    $region20: #{tpu_custom_call.1} parent=1 // pred_region
      %s55 = ssub.s32 2048, 2048
      %56 = vsyncadd [#allocation9], %s55
      %s57 = sshll.u32 [#allocation8], 4
      %s58 = int_to_ptr.vmem [resolvable:$true] %s57
      %63 = dma.hbm_to_vmem [thread:$0]  %s4, 2048, %s58, [#allocation9], 256, 256, 16
    $region21: #{tpu_custom_call.1} parent=1 // pred_fallthru
      _
    // Predicated region
    $region22: #{tpu_custom_call.1} parent=1 // pred_check
      _
    $region23: #{tpu_custom_call.1} parent=1 // pred_check_branch
      %65 = sbr.rel (0) target = $region25
    $region24: #{tpu_custom_call.1} parent=1 // pred_region
      _
    $region25: #{tpu_custom_call.1} parent=1 // pred_fallthru
      _
    // Predicated region
    $region26: #{tpu_custom_call.1} parent=1 // pred_check
      _
    $region27: #{tpu_custom_call.1} parent=1 // pred_check_branch
      %67 = sbr.rel (0) target = $region29
    $region28: #{tpu_custom_call.1} parent=1 // pred_region
      %68 = dma.done [#allocation3], 128
    $region29: #{tpu_custom_call.1} parent=1 // pred_fallthru
      _
    // Predicated region
    $region30: #{tpu_custom_call.1} parent=1 // pred_check
      _
    $region31: #{tpu_custom_call.1} parent=1 // pred_check_branch
      %70 = sbr.rel (0) target = $region33
    $region32: #{tpu_custom_call.1} parent=1 // pred_region
      %71 = dma.done [#allocation6], 128
    $region33: #{tpu_custom_call.1} parent=1 // pred_fallthru
      _
    // Predicated region
    $region34: #{tpu_custom_call.1} parent=1 // pred_check
      _
    $region35: #{tpu_custom_call.1} parent=1 // pred_check_branch
      %73 = sbr.rel (0) target = $region37
    $region36: #{tpu_custom_call.1} parent=1 // pred_region
      %74 = dma.done [#allocation6], 512
    $region37: #{tpu_custom_call.1} parent=1 // pred_fallthru
      _
    // Predicated region
    $region38: #{tpu_custom_call.1} parent=1 // pred_check
      _
    $region39: #{tpu_custom_call.1} parent=1 // pred_check_branch
      %76 = sbr.rel (0) target = $region41
    $region40: #{tpu_custom_call.1} parent=1 // pred_region
      %77 = dma.done [#allocation9], 2048
    $region41: #{tpu_custom_call.1} parent=1 // pred_fallthru
      _
    %v78 = vld [vmem:[#allocation2] sm:$0xff]
    %v79 = vld [vmem:[#allocation5] sm:$0xff]
    %v80 = vld [vmem:[#allocation7] sm:$0xff]
    %v81 = vld [vmem:[#allocation7 + $0x8] sm:$0xff]
    %v82 = vld [vmem:[#allocation7 + $0x10] sm:$0xff]
    %v83 = vld [vmem:[#allocation7 + $0x18] sm:$0xff]
    %v84 = vld [vmem:[%s3] sm:$0x1]
    %v86 = vlaneseq
    %v87 = vshrl.u32 %v86, 7
    %v88 = vsub.s32 0, %v87
    %v89 = vrot.slane %v84, %v88
    %vm91 = vcmask 261120
    %v93 = vsel %vm91, %v78, 0
    %95 = vmatprep.subr.mxu0 0.0
    %96 = vmatpush1.msra.mxu0 0.0
    %97 = vmatprep.subr.mxu0 0.0
    %98 = vmatpush1.msra.mxu0 0.0
    %99 = vmatprep.subr.mxu0 0.0
    %100 = vmatpush1.msra.mxu0 0.0
    %101 = vmatprep.subr.mxu0 0.0
    %102 = vmatpush1.msra.mxu0 0.0
    %103 = vmatprep.subr.mxu0 0.0
    %104 = vmatpush1.msra.mxu0 0.0
    %105 = vmatprep.subr.mxu0 0.0
    %106 = vmatpush1.msra.mxu0 0.0
    %107 = vmatprep.subr.mxu0 0.0
    %108 = vmatpush1.msra.mxu0 0.0
    %109 = vmatprep.subr.mxu0 0.0
    %110 = vmatpush1.msra.mxu0 0.0
    %111 = vmatprep.subr.mxu0 0.0
    %112 = vmatpush1.msra.mxu0 0.0
    %113 = vmatprep.subr.mxu0 0.0
    %114 = vmatpush1.msra.mxu0 0.0
    %115 = vmatprep.subr.mxu0 0.0
    %116 = vmatpush1.msra.mxu0 0.0
    %117 = vmatprep.subr.mxu0 0.0
    %118 = vmatpush1.msra.mxu0 0.0
    %119 = vmatprep.subr.mxu0 0.0
    %120 = vmatpush1.msra.mxu0 %v83
    %121 = vmatprep.subr.mxu0 0.0
    %122 = vmatpush1.msra.mxu0 %v82
    %123 = vmatprep.subr.mxu0 0.0
    %124 = vmatpush1.msra.mxu0 %v81
    %125 = vmatprep.subr.mxu0 0.0
    %126 = vmatpush1.msra.mxu0 %v80
    %127 = vmatprep.subr.mxu0 0.0
    %128 = vmatpush2.msra.mxu0 0.0
    %129 = vmatprep.subr.mxu0 0.0
    %130 = vmatpush2.msra.mxu0 0.0
    %131 = vmatprep.subr.mxu0 0.0
    %132 = vmatpush2.msra.mxu0 0.0
    %133 = vmatprep.subr.mxu0 0.0
    %134 = vmatpush2.msra.mxu0 0.0
    %135 = vmatprep.subr.mxu0 0.0
    %136 = vmatpush2.msra.mxu0 0.0
    %137 = vmatprep.subr.mxu0 0.0
    %138 = vmatpush2.msra.mxu0 0.0
    %139 = vmatprep.subr.mxu0 0.0
    %140 = vmatpush2.msra.mxu0 0.0
    %141 = vmatprep.subr.mxu0 0.0
    %142 = vmatpush2.msra.mxu0 0.0
    %143 = vmatprep.subr.mxu0 0.0
    %144 = vmatpush2.msra.mxu0 0.0
    %145 = vmatprep.subr.mxu0 0.0
    %146 = vmatpush2.msra.mxu0 0.0
    %147 = vmatprep.subr.mxu0 0.0
    %148 = vmatpush2.msra.mxu0 0.0
    %149 = vmatprep.subr.mxu0 0.0
    %150 = vmatpush2.msra.mxu0 0.0
    %151 = vmatprep.subr.mxu0 0.0
    %152 = vmatpush2.msra.mxu0 0.0
    %153 = vmatprep.subr.mxu0 0.0
    %154 = vmatpush2.msra.mxu0 0.0
    %155 = vmatprep.subr.mxu0 0.0
    %156 = vmatpush2.msra.mxu0 0.0
    %157 = vmatprep.subr.mxu0 0.0
    %158 = vmatpush2.msra.mxu0 0.0
    %159 = vmatprep.mubr.f32.mxu0 0.0
    %160 = vmatmul.mubr.f32.gmra.mxu0 %v93
    %v161 = vpop.f32.mrf.mxu0
    %v162 = vadd.f32 %v89, %v161
    %v163 = vpop.f32.mrf.mxu0
    %164 = vdwg.mxu0
    %v165 = vtanh.pop %v162
    %v166 = vadd.f32 %v165, %v79
    %v167 = vmul.f32 %v166, 0.5
    %v168 = vld [vmem:[#allocation8] sm:$0xff]
    %v169 = vld [vmem:[#allocation8 + $0x8] sm:$0xff]
    %v170 = vld [vmem:[#allocation8 + $0x10] sm:$0xff]
    %v171 = vld [vmem:[#allocation8 + $0x18] sm:$0xff]
    %v172 = vld [vmem:[#allocation8 + $0x20] sm:$0xff]
    %v173 = vld [vmem:[#allocation8 + $0x28] sm:$0xff]
    %v174 = vld [vmem:[#allocation8 + $0x30] sm:$0xff]
    %v175 = vld [vmem:[#allocation8 + $0x38] sm:$0xff]
    %v176 = vld [vmem:[#allocation8 + $0x40] sm:$0xff]
    %v177 = vld [vmem:[#allocation8 + $0x48] sm:$0xff]
    %v178 = vld [vmem:[#allocation8 + $0x50] sm:$0xff]
    %v179 = vld [vmem:[#allocation8 + $0x58] sm:$0xff]
    %v180 = vld [vmem:[#allocation8 + $0x60] sm:$0xff]
    %v181 = vld [vmem:[#allocation8 + $0x68] sm:$0xff]
    %v182 = vld [vmem:[#allocation8 + $0x70] sm:$0xff]
    %v183 = vld [vmem:[#allocation8 + $0x78] sm:$0xff]
    %v184 = vld [vmem:[%s5] sm:$0x3]
    %v186 = vlaneseq
    %v187 = vshrl.u32 %v186, 7
    %v188 = vsub.s32 0, %v187
    %v189 = vrot.slane %v184, %v188
    %v190 = vlaneseq
    %v191 = vshrl.u32 %v190, 7
    %v192 = vsub.s32 1, %v191
    %v193 = vrot.slane %v184, %v192
    %vm196 = vcmask 523264
    %v198 = vsel %vm196, %v167, 0
    %200 = vmatprep.subr.mxu0 0.0
    %201 = vmatpush1.msra.mxu0 0.0
    %202 = vmatprep.subr.mxu0 0.0
    %203 = vmatpush1.msra.mxu0 0.0
    %204 = vmatprep.subr.mxu0 0.0
    %205 = vmatpush1.msra.mxu0 0.0
    %206 = vmatprep.subr.mxu0 0.0
    %207 = vmatpush1.msra.mxu0 0.0
    %208 = vmatprep.subr.mxu0 0.0
    %209 = vmatpush1.msra.mxu0 0.0
    %210 = vmatprep.subr.mxu0 0.0
    %211 = vmatpush1.msra.mxu0 0.0
    %212 = vmatprep.subr.mxu0 0.0
    %213 = vmatpush1.msra.mxu0 0.0
    %214 = vmatprep.subr.mxu0 0.0
    %215 = vmatpush1.msra.mxu0 0.0
    %216 = vmatprep.subr.mxu0 %v183
    %217 = vmatpush1.msra.mxu0 %v182
    %218 = vmatprep.subr.mxu0 %v181
    %219 = vmatpush1.msra.mxu0 %v180
    %220 = vmatprep.subr.mxu0 %v179
    %221 = vmatpush1.msra.mxu0 %v178
    %222 = vmatprep.subr.mxu0 %v177
    %223 = vmatpush1.msra.mxu0 %v176
    %224 = vmatprep.subr.mxu0 %v175
    %225 = vmatpush1.msra.mxu0 %v174
    %226 = vmatprep.subr.mxu0 %v173
    %227 = vmatpush1.msra.mxu0 %v172
    %228 = vmatprep.subr.mxu0 %v171
    %229 = vmatpush1.msra.mxu0 %v170
    %230 = vmatprep.subr.mxu0 %v169
    %231 = vmatpush1.msra.mxu0 %v168
    %232 = vmatprep.subr.mxu0 0.0
    %233 = vmatpush2.msra.mxu0 0.0
    %234 = vmatprep.subr.mxu0 0.0
    %235 = vmatpush2.msra.mxu0 0.0
    %236 = vmatprep.subr.mxu0 0.0
    %237 = vmatpush2.msra.mxu0 0.0
    %238 = vmatprep.subr.mxu0 0.0
    %239 = vmatpush2.msra.mxu0 0.0
    %240 = vmatprep.subr.mxu0 0.0
    %241 = vmatpush2.msra.mxu0 0.0
    %242 = vmatprep.subr.mxu0 0.0
    %243 = vmatpush2.msra.mxu0 0.0
    %244 = vmatprep.subr.mxu0 0.0
    %245 = vmatpush2.msra.mxu0 0.0
    %246 = vmatprep.subr.mxu0 0.0
    %247 = vmatpush2.msra.mxu0 0.0
    %248 = vmatprep.subr.mxu0 0.0
    %249 = vmatpush2.msra.mxu0 0.0
    %250 = vmatprep.subr.mxu0 0.0
    %251 = vmatpush2.msra.mxu0 0.0
    %252 = vmatprep.subr.mxu0 0.0
    %253 = vmatpush2.msra.mxu0 0.0
    %254 = vmatprep.subr.mxu0 0.0
    %255 = vmatpush2.msra.mxu0 0.0
    %256 = vmatprep.subr.mxu0 0.0
    %257 = vmatpush2.msra.mxu0 0.0
    %258 = vmatprep.subr.mxu0 0.0
    %259 = vmatpush2.msra.mxu0 0.0
    %260 = vmatprep.subr.mxu0 0.0
    %261 = vmatpush2.msra.mxu0 0.0
    %262 = vmatprep.subr.mxu0 0.0
    %263 = vmatpush2.msra.mxu0 0.0
    %264 = vmatprep.mubr.f32.mxu0 0.0
    %265 = vmatmul.mubr.f32.gmra.mxu0 %v198
    %v266 = vpop.f32.mrf.mxu0
    %v267 = vadd.f32 %v189, %v266
    %v268 = vpop.f32.mrf.mxu0
    %v269 = vadd.f32 %v193, %v268
    %270 = vdwg.mxu0
    %vm271 = vcmp.gt.f32.partialorder %v269, 20.0
    %v272 = vmin.f32 %v269, 20.0
    %v273 = vmul.f32 %v272, 1.442695
    %v274 = vpow.pop %v273
    %v275 = vadd.f32 %v274, 1.0
    %v276 = vlog2.pop %v275
    %v277 = vmul.f32 %v276, 0.6931472
    %v278 = vmul.f32 -0.5, %v274
    %v279 = vadd.f32 %v278, 1.0
    %v280 = vmul.f32 %v279, %v274
    %v281 = vand.u32 2147483647, %v274
    %vm282 = vcmp.lt.f32.partialorder %v281, 0.0004427343
    %v283 = vsel %vm282, %v280, %v277
    %v284 = vsel %vm271, %v269, %v283
    %285 = vst [vmem:[#allocation10] sm:$0xff] %v267
    %286 = vst [vmem:[#allocation11] sm:$0xff] %v284
    // Predicated region
    $region42: #{tpu_custom_call.1} parent=1 // pred_check
      _
    $region43: #{tpu_custom_call.1} parent=1 // pred_check_branch
      %288 = sbr.rel (0) target = $region45
    $region44: #{tpu_custom_call.1} parent=1 // pred_region
      %s290 = ssub.s32 128, 128
      %291 = vsyncadd [#allocation4], %s290
      %s293 = sshll.u32 [#allocation10], 4
      %s294 = int_to_ptr.vmem [resolvable:$true] %s293
      %296 = dma.vmem_to_hbm [thread:$0]  %s294, 128, %s6, [#allocation4]
    $region45: #{tpu_custom_call.1} parent=1 // pred_fallthru
      _
    // Predicated region
    $region46: #{tpu_custom_call.1} parent=1 // pred_check
      _
    $region47: #{tpu_custom_call.1} parent=1 // pred_check_branch
      %298 = sbr.rel (0) target = $region49
    $region48: #{tpu_custom_call.1} parent=1 // pred_region
      %s300 = ssub.s32 128, 128
      %301 = vsyncadd [#allocation12], %s300
      %s303 = sshll.u32 [#allocation11], 4
      %s304 = int_to_ptr.vmem [resolvable:$true] %s303
      %306 = dma.vmem_to_hbm [thread:$0]  %s304, 128, %s7, [#allocation12]
    $region49: #{tpu_custom_call.1} parent=1 // pred_fallthru
      _
    // Predicated region
    $region50: #{tpu_custom_call.1} parent=1 // pred_check
      _
    $region51: #{tpu_custom_call.1} parent=1 // pred_check_branch
      %308 = sbr.rel (0) target = $region53
    $region52: #{tpu_custom_call.1} parent=1 // pred_region
      %309 = dma.done [#allocation4], 128
    $region53: #{tpu_custom_call.1} parent=1 // pred_fallthru
      _
    // Predicated region
    $region54: #{tpu_custom_call.1} parent=1 // pred_check
      _
    $region55: #{tpu_custom_call.1} parent=1 // pred_check_branch
      %311 = sbr.rel (0) target = $region57
    $region56: #{tpu_custom_call.1} parent=1 // pred_region
      %312 = dma.done [#allocation12], 128
    $region57: #{tpu_custom_call.1} parent=1 // pred_fallthru
      _
    %313 = vsyncpa [#allocation3], 1
    %314 = vsyncpa [#allocation6], 1
    %315 = vsyncpa [#allocation9], 1
    %316 = vsyncpa [#allocation4], 1
    %317 = vsyncpa [#allocation12], 1

</llo_original>
